<compile_context>
chip_gen: v5e
topology: v5e:2x2
jax: 0.10.0
libtpu: 0.0.40
codegen_flags: <defaults>
</compile_context>

<pallas_src>
import math
from functools import partial

import jax
import jax.numpy as jnp
from jax.experimental import pallas as pl
from jax.experimental.pallas import tpu as pltpu

EPS = 1e-20
LOG_EPS = math.log(EPS)


def _contrastive_kernel(scale_ref, a_ref, t_ref, out_i_ref, out_j_ref, *,
                        decoupled: bool, layers_per_block: int,
                        matmul_dtype, exp_dtype):
    """Contrastive-loss pieces for `layers_per_block` layers.

    scale_ref : SMEM (L,)          scalar-prefetched exp(temperature)
    a_ref     : VMEM (Lc, B, D)    audio latents (f32)
    t_ref     : VMEM (Lc, B, D)    text latents (f32)
    out_i_ref : VMEM (Lc, B, 1)    per-sample  -log(num) + 0.5*log(denom_i)
    out_j_ref : VMEM (Lc, 1, B)    per-sample   0.5*log(denom_j)
    """
    g = pl.program_id(0)

    for li in range(layers_per_block):          # small static unroll (<= 8)
        layer = g * layers_per_block + li
        scale = scale_ref[layer]                # exp(temperature), scalar
        a = a_ref[li]                           # (B, D) f32
        t = t_ref[li]                           # (B, D) f32
        b = a.shape[0]

        # Fold the temperature into the (B, D) operand: B*D multiplies instead
        # of rescaling the (B, B) similarity matrix.
        a_s = a * scale

        # einsum('i d, j d -> i j') on the MXU: contract the shared D axis
        # directly (no explicit transpose), low-precision inputs, f32 accum.
        sims = jax.lax.dot_general(
            a_s.astype(matmul_dtype), t.astype(matmul_dtype),
            dimension_numbers=(((1,), (1,)), ((), ())),
            preferred_element_type=jnp.float32)                   # (B, B) f32

        # Diagonal similarities computed directly (B values, not B^2 masking).
        diag_sims = jnp.sum(a_s * t, axis=-1, keepdims=True)      # (B, 1) f32

        # Numerically safe denominators: shift by the per-layer max so exp
        # never overflows even when the learned temperature grows.
        m = jnp.max(sims, axis=1, keepdims=True)                  # (B, 1)
        m = jnp.max(m, axis=0, keepdims=True)                     # (1, 1)
        e = jnp.exp((sims - m).astype(exp_dtype))                 # (B, B)

        if decoupled:
            # Zero the diagonal of exp(sims) exactly like the reference
            # masked_fill (same precision path as the denominator sums).
            eye = (jax.lax.broadcasted_iota(jnp.int32, (b, b), 0) ==
                   jax.lax.broadcasted_iota(jnp.int32, (b, b), 1))
            e = jnp.where(eye, jnp.zeros_like(e), e)

        e32 = e.astype(jnp.float32)
        denom_i = jnp.sum(e32, axis=1, keepdims=True)             # (B, 1)
        denom_j = jnp.sum(e32, axis=0, keepdims=True)             # (1, B)

        # log(clamp(exp(x), eps)) == max(x, log(eps)); the denominators get
        # the max shift added back.
        log_num = jnp.maximum(diag_sims, LOG_EPS)                 # (B, 1)
        log_di = m + jnp.log(jnp.maximum(denom_i, EPS))           # (B, 1)
        log_dj = m + jnp.log(jnp.maximum(denom_j, EPS))           # (1, B)

        out_i_ref[li] = -log_num + 0.5 * log_di                   # (B, 1)
        out_j_ref[li] = 0.5 * log_dj                              # (1, B)


def _detect_tpu():
    """Best-effort (vmem_capacity_bytes, tensorcores_per_chip, bf16_transcendentals)."""
    vmem = None
    try:
        vmem = int(pltpu.get_tpu_info().vmem_capacity_bytes)
    except Exception:
        vmem = None
    gen = None
    try:
        kind = jax.devices()[0].device_kind.lower()
        for g in (7, 6, 5, 4):
            if (f"v{g}" in kind) or (f"tpu{g}" in kind):
                gen = g
                break
    except Exception:
        gen = None
    if vmem is None:
        # Conservative default: v7x has the smallest VMEM (64 MiB / TensorCore).
        vmem = (64 << 20) if (gen is None or gen >= 7) else (128 << 20)
    num_tc = 2 if (gen is None or gen >= 7) else 1     # v7x: 2 TCs / chip
    bf16_eup = gen in (6, 7)                           # bf16 EUP/VPU on v6e / v7x
    return vmem, num_tc, bf16_eup


def _choose_blocking(L, B, D, budget_bytes, min_grid_steps, exp_itemsize):
    """Pick (layers_per_block, padded_L).

    layers_per_block is capped at 8 (enough to amortize the ~0.35us/step grid
    overhead) and sized so the double-buffered f32 input blocks plus the
    per-unrolled-layer (B,B)/(B,D) temporaries fit the VMEM budget.  When
    min_grid_steps >= 2 the grid keeps at least 2 steps so both v7x
    TensorCores get work.  Non-divisible L either falls back to a divisor or
    pads the layer axis (padded layers are sliced off before the final sum).
    """
    max_lc = min(L, 8)

    def fits(lc):
        inputs = 2 * 2 * lc * B * D * 4                 # audio+text, double buffered
        per_layer = (B * B * (8 + exp_itemsize)         # sims f32 + e + e32
                     + B * D * (4 + 4))                 # scaled operand + casts
        return inputs + lc * per_layer <= budget_bytes

    candidates = []
    for lc in range(1, max_lc + 1):
        if not fits(lc):
            break
        steps = -(-L // lc)                             # ceil div
        if steps < min_grid_steps:
            break
        candidates.append((steps, steps * lc - L, lc))
    if not candidates:
        # TODO(synk): row-blocked (TB, B) grid axis for batches whose (B, B)
        # working set does not fit VMEM even at Lc=1.
        return 1, L

    best_steps = min(c[0] for c in candidates)
    exact = [c for c in candidates if c[1] == 0 and c[0] <= 2 * best_steps]
    steps, _, lc = min(exact) if exact else min(candidates)
    return lc, steps * lc


def softmax_contrastive_loss(audio_latents, text_latents, temperatures,
                             decoupled_contrastive_learning=False,
                             matmul_dtype=jnp.bfloat16):
    """JAX/Pallas equivalent of SoftmaxContrastiveLearning.forward.

    audio_latents, text_latents: (L, B, D) or (B, D)
    temperatures: (L,) (or (L,1,1)) log temperatures
    Returns scalar loss (sum over layers of per-layer mean contrastive loss).
    """
    if audio_latents.ndim == 2:
        audio_latents = audio_latents[None, ...]
    if text_latents.ndim == 2:
        text_latents = text_latents[None, ...]
    # TODO(synk): the torch.distributed AllGather branch is not implemented
    # (single-device); very large gathered batches would additionally need the
    # row-blocked (TB, B) accumulation path noted above.

    # Keep latents in f32 at the kernel boundary; the cast to the MXU dtype
    # happens in-kernel so no standalone HBM convert pass is generated.
    audio = audio_latents.astype(jnp.float32)
    text = text_latents.astype(jnp.float32)
    scales = jnp.exp(temperatures.reshape(-1).astype(jnp.float32))   # exp(temp)

    L, B, D = audio.shape
    assert text.shape == (L, B, D)
    assert scales.shape == (L,)
    # TODO(synk): best layout has D (and B for bf16 sublanes) as multiples of
    # 128 / 16; that is an upstream dim_latent choice, not padded here.

    vmem_bytes, num_tc, bf16_eup = _detect_tpu()
    budget = max(16 << 20, vmem_bytes // 2)     # picker budget == vmem limit we pass
    exp_dtype = jnp.bfloat16 if bf16_eup else jnp.float32
    min_steps = min(2 if num_tc >= 2 else 1, L)

    lc, L_pad = _choose_blocking(L, B, D, budget, min_steps,
                                 jnp.dtype(exp_dtype).itemsize)
    if L_pad != L:                               # awkward L: pad the layer axis
        pad = L_pad - L
        audio = jnp.pad(audio, ((0, pad), (0, 0), (0, 0)))
        text = jnp.pad(text, ((0, pad), (0, 0), (0, 0)))
        scales = jnp.pad(scales, ((0, pad),), constant_values=1.0)
    grid = (L_pad // lc,)

    kernel = partial(_contrastive_kernel,
                     decoupled=decoupled_contrastive_learning,
                     layers_per_block=lc,
                     matmul_dtype=jnp.dtype(matmul_dtype),
                     exp_dtype=exp_dtype)

    out_i, out_j = pl.pallas_call(
        kernel,
        out_shape=(jax.ShapeDtypeStruct((L_pad, B, 1), jnp.float32),
                   jax.ShapeDtypeStruct((L_pad, 1, B), jnp.float32)),
        grid_spec=pltpu.PrefetchScalarGridSpec(
            num_scalar_prefetch=1,                    # exp(temperatures) -> SMEM
            grid=grid,
            in_specs=[
                pl.BlockSpec((lc, B, D), lambda g, s: (g, 0, 0)),
                pl.BlockSpec((lc, B, D), lambda g, s: (g, 0, 0)),
            ],
            out_specs=(
                pl.BlockSpec((lc, B, 1), lambda g, s: (g, 0, 0)),
                pl.BlockSpec((lc, 1, B), lambda g, s: (g, 0, 0)),
            ),
        ),
        compiler_params=pltpu.CompilerParams(
            # layers are independent -> let v7x shard grid steps across both TCs
            dimension_semantics=("parallel",),
            vmem_limit_bytes=int(budget)),
    )(scales, audio, text)

    # Tiny finalize on (L, B): mean over batch, sum over (real) layers.
    per_sample = out_i[:L, :, 0] + out_j[:L, 0, :]
    return jnp.sum(jnp.mean(per_sample, axis=-1))


def _reference(audio, text, temps, decoupled=False):
    """Plain-JAX f32 reference mirroring the PyTorch module."""
    sims = jnp.einsum('lid,ljd->lij', audio, text,
                      precision=jax.lax.Precision.HIGHEST)
    sims = sims * jnp.exp(temps)[:, None, None]
    e = jnp.exp(sims)
    num = jnp.diagonal(e, axis1=-2, axis2=-1)                      # (L, B)
    if decoupled:
        b = e.shape[-1]
        e = jnp.where(jnp.eye(b, dtype=bool)[None], 0.0, e)
    di = jnp.sum(e, axis=-1)                                       # (L, B)
    dj = jnp.sum(e, axis=-2)                                       # (L, B)
    logc = lambda x: jnp.log(jnp.maximum(x, EPS))
    loss = -logc(num) + 0.5 * (logc(di) + logc(dj))
    return jnp.sum(jnp.mean(loss, axis=-1))


if __name__ == "__main__":
    key = jax.random.PRNGKey(0)
    k_a, k_t = jax.random.split(key)
    init_temp = 10.0

    for (L, B, D) in ((2, 8, 32), (3, 8, 32)):
        audio = jax.random.normal(k_a, (L, B, D), dtype=jnp.float32) * 0.1
        text = jax.random.normal(k_t, (L, B, D), dtype=jnp.float32) * 0.1
        # Deterministic init matching nn.Parameter(ones(L,1,1)*log(init_temp)).
        temperatures = jnp.full((L,), math.log(init_temp), dtype=jnp.float32)

        for decoupled in (False, True):
            out = softmax_contrastive_loss(
                audio, text, temperatures,
                decoupled_contrastive_learning=decoupled)
            out = jax.block_until_ready(out)
            ref = _reference(audio, text, temperatures, decoupled=decoupled)
            # bf16 MXU (and possibly bf16 exp) with f32 accumulation -> loose tol
            assert jnp.allclose(out, ref, rtol=2e-2, atol=2e-2), (
                L, decoupled, out, ref)

    print("KERNEL_OK")
</pallas_src>

<mosaic_0001>
module attributes {stable_mosaic.version = 11 : i64} {
  func.func @_contrastive_kernel(%arg0: i32, %arg1: memref<2xf32, #tpu.memory_space<smem>>, %arg2: memref<1x8x32xf32, #tpu.memory_space<vmem>>, %arg3: memref<1x8x32xf32, #tpu.memory_space<vmem>>, %arg4: memref<1x8x1xf32, #tpu.memory_space<vmem>>, %arg5: memref<1x1x8xf32, #tpu.memory_space<vmem>>) attributes {dimension_semantics = [#tpu.dimension_semantics<parallel>], iteration_bounds = array<i64: 2>, scalar_prefetch = 1 : i64, scratch_operands = 0 : i64, tpu.core_type = #tpu.core_type<tc>, window_params = [{transform_indices = @transform_0, window_bounds = array<i64: 1, 8, 32>}, {transform_indices = @transform_1, window_bounds = array<i64: 1, 8, 32>}, {transform_indices = @transform_2, window_bounds = array<i64: 1, 8, 1>}, {transform_indices = @transform_3, window_bounds = array<i64: 1, 1, 8>}]} {
    %c1_i32 = arith.constant 1 : i32
    %0 = arith.muli %arg0, %c1_i32 : i32
    %c0_i32 = arith.constant 0 : i32
    %1 = arith.addi %0, %c0_i32 : i32
    %2 = arith.index_cast %1 : i32 to index
    %3 = memref.load %arg1[%2] : memref<2xf32, #tpu.memory_space<smem>>
    %c0 = arith.constant 0 : index
    %c0_0 = arith.constant 0 : index
    %c0_1 = arith.constant 0 : index
    %4 = vector.load %arg2[%c0, %c0_0, %c0_1] : memref<1x8x32xf32, #tpu.memory_space<vmem>>, vector<1x8x32xf32>
    %5 = vector.shape_cast %4 : vector<1x8x32xf32> to vector<8x32xf32>
    %c0_2 = arith.constant 0 : index
    %c0_3 = arith.constant 0 : index
    %c0_4 = arith.constant 0 : index
    %6 = vector.load %arg3[%c0_2, %c0_3, %c0_4] : memref<1x8x32xf32, #tpu.memory_space<vmem>>, vector<1x8x32xf32>
    %7 = vector.shape_cast %6 : vector<1x8x32xf32> to vector<8x32xf32>
    %8 = vector.broadcast %3 : f32 to vector<8x32xf32>
    %9 = arith.mulf %5, %8 : vector<8x32xf32>
    %10 = arith.truncf %9 : vector<8x32xf32> to vector<8x32xbf16>
    %11 = arith.truncf %7 : vector<8x32xf32> to vector<8x32xbf16>
    %cst = arith.constant dense<0.000000e+00> : vector<8x8xf32>
    %12 = tpu.matmul %10, %11, %cst {dimension_numbers = #tpu.dot_dimension_numbers<[1], [1], [0], [0], [0, 0, 1, 0], [], []>} : vector<8x32xbf16>, vector<8x32xbf16>, vector<8x8xf32> -> vector<8x8xf32>
    %13 = arith.mulf %9, %7 : vector<8x32xf32>
    %cst_5 = arith.constant dense<0.000000e+00> : vector<8xf32>
    %14 = vector.multi_reduction <add>, %13, %cst_5 [1] : vector<8x32xf32> to vector<8xf32>
    %15 = vector.shape_cast %14 : vector<8xf32> to vector<8x1xf32>
    %cst_6 = arith.constant dense<0xFF800000> : vector<8xf32>
    %16 = vector.multi_reduction <maximumf>, %12, %cst_6 [1] : vector<8x8xf32> to vector<8xf32>
    %17 = vector.shape_cast %16 : vector<8xf32> to vector<8x1xf32>
    %cst_7 = arith.constant dense<0xFF800000> : vector<1xf32>
    %18 = vector.multi_reduction <maximumf>, %17, %cst_7 [0] : vector<8x1xf32> to vector<1xf32>
    %19 = vector.shape_cast %18 : vector<1xf32> to vector<1x1xf32>
    %20 = vector.broadcast %19 : vector<1x1xf32> to vector<8x8xf32>
    %21 = arith.subf %12, %20 : vector<8x8xf32>
    %22 = math.exp %21 : vector<8x8xf32>
    %cst_8 = arith.constant dense<0.000000e+00> : vector<8xf32>
    %23 = vector.multi_reduction <add>, %22, %cst_8 [1] : vector<8x8xf32> to vector<8xf32>
    %24 = vector.shape_cast %23 : vector<8xf32> to vector<8x1xf32>
    %cst_9 = arith.constant dense<0.000000e+00> : vector<8xf32>
    %25 = vector.multi_reduction <add>, %22, %cst_9 [0] : vector<8x8xf32> to vector<8xf32>
    %26 = vector.shape_cast %25 : vector<8xf32> to vector<1x8xf32>
    %cst_10 = arith.constant -4.605170e+01 : f32
    %27 = vector.broadcast %cst_10 : f32 to vector<8x1xf32>
    %28 = arith.maximumf %15, %27 : vector<8x1xf32>
    %cst_11 = arith.constant 9.99999968E-21 : f32
    %29 = vector.broadcast %cst_11 : f32 to vector<8x1xf32>
    %30 = arith.maximumf %24, %29 : vector<8x1xf32>
    %31 = math.log %30 : vector<8x1xf32>
    %32 = vector.broadcast %19 : vector<1x1xf32> to vector<8x1xf32>
    %33 = arith.addf %32, %31 : vector<8x1xf32>
    %cst_12 = arith.constant 9.99999968E-21 : f32
    %34 = vector.broadcast %cst_12 : f32 to vector<1x8xf32>
    %35 = arith.maximumf %26, %34 : vector<1x8xf32>
    %36 = math.log %35 : vector<1x8xf32>
    %37 = vector.broadcast %19 : vector<1x1xf32> to vector<1x8xf32>
    %38 = arith.addf %37, %36 : vector<1x8xf32>
    %cst_13 = arith.constant 0.000000e+00 : f32
    %39 = vector.broadcast %cst_13 : f32 to vector<8x1xf32>
    %40 = arith.subf %39, %28 : vector<8x1xf32>
    %cst_14 = arith.constant 5.000000e-01 : f32
    %41 = vector.broadcast %cst_14 : f32 to vector<8x1xf32>
    %42 = arith.mulf %41, %33 : vector<8x1xf32>
    %43 = arith.addf %40, %42 : vector<8x1xf32>
    %c0_15 = arith.constant 0 : index
    %c0_16 = arith.constant 0 : index
    %c0_17 = arith.constant 0 : index
    %44 = vector.load %arg4[%c0_15, %c0_16, %c0_17] : memref<1x8x1xf32, #tpu.memory_space<vmem>>, vector<1x8x1xf32>
    %45 = vector.shape_cast %44 : vector<1x8x1xf32> to vector<8x1xf32>
    %46 = vector.shape_cast %43 : vector<8x1xf32> to vector<1x8x1xf32>
    tpu.vector_store %arg4[%c0_15, %c0_16, %c0_17], %46 {strides = array<i32>} : memref<1x8x1xf32, #tpu.memory_space<vmem>>, vector<1x8x1xf32>,
    %cst_18 = arith.constant 5.000000e-01 : f32
    %47 = vector.broadcast %cst_18 : f32 to vector<1x8xf32>
    %48 = arith.mulf %47, %38 : vector<1x8xf32>
    %c0_19 = arith.constant 0 : index
    %c0_20 = arith.constant 0 : index
    %c0_21 = arith.constant 0 : index
    %49 = vector.load %arg5[%c0_19, %c0_20, %c0_21] : memref<1x1x8xf32, #tpu.memory_space<vmem>>, vector<1x1x8xf32>
    %50 = vector.shape_cast %49 : vector<1x1x8xf32> to vector<1x8xf32>
    %51 = vector.shape_cast %48 : vector<1x8xf32> to vector<1x1x8xf32>
    tpu.vector_store %arg5[%c0_19, %c0_20, %c0_21], %51 {strides = array<i32>} : memref<1x1x8xf32, #tpu.memory_space<vmem>>, vector<1x1x8xf32>,
    return
  }
  func.func @transform_0(%arg0: i32, %arg1: memref<2xf32, #tpu.memory_space<smem>>) -> (i32, i32, i32) {
    %c0_i32 = arith.constant 0 : i32
    %c0_i32_0 = arith.constant 0 : i32
    %c0_i32_1 = arith.constant 0 : i32
    return %arg0, %c0_i32, %c0_i32_0 : i32, i32, i32
  }
  func.func @transform_1(%arg0: i32, %arg1: memref<2xf32, #tpu.memory_space<smem>>) -> (i32, i32, i32) {
    %c0_i32 = arith.constant 0 : i32
    %c0_i32_0 = arith.constant 0 : i32
    %c0_i32_1 = arith.constant 0 : i32
    return %arg0, %c0_i32, %c0_i32_0 : i32, i32, i32
  }
  func.func @transform_2(%arg0: i32, %arg1: memref<2xf32, #tpu.memory_space<smem>>) -> (i32, i32, i32) {
    %c0_i32 = arith.constant 0 : i32
    %c0_i32_0 = arith.constant 0 : i32
    %c0_i32_1 = arith.constant 0 : i32
    return %arg0, %c0_i32, %c0_i32_0 : i32, i32, i32
  }
  func.func @transform_3(%arg0: i32, %arg1: memref<2xf32, #tpu.memory_space<smem>>) -> (i32, i32, i32) {
    %c0_i32 = arith.constant 0 : i32
    %c0_i32_0 = arith.constant 0 : i32
    %c0_i32_1 = arith.constant 0 : i32
    return %arg0, %c0_i32, %c0_i32_0 : i32, i32, i32
  }
}

</mosaic_0001>

<llo_original>
// kernel: tpu_custom_call.1
$region0: #{tpu_custom_call.1}
  #allocation0 [shape = 'u32[]', space=smem, size = 0x4, offset = 0x4, fixed_abs, tag = 'smem constant byte address 0x4 - core index']
  #allocation1 [shape = 'u32[72,128]{1,0:T(1,128)}', space=vmem, size = 0x9000, scoped, tag = 'internal scratch']
  #allocation2 [shape = 's32[1]{0}', space=sflag, size = 0x4, scoped, tag = 'scoped memory for tpu_custom_call.1']
  #allocation3 [shape = 'u8[512]{0}', space=smem, size = 0x200, scoped, tag = 'prefetched SMEM operand 0']
  %s0 = inlined_call_operand.hbm [shape: f32[2], index: 0, kind: input, shape index: {}]
  %s1 = inlined_call_operand.hbm [shape: f32[2,8,32], index: 1, kind: input, shape index: {}]
  %s2 = inlined_call_operand.hbm [shape: f32[2,8,32], index: 2, kind: input, shape index: {}]
  %s3 = inlined_call_operand.vmem [shape: f32[2,8,1], index: 3, kind: output, shape index: {0}]
  %s4 = inlined_call_operand.hbm [shape: f32[2,1,8], index: 4, kind: output, shape index: {1}]
  %5 = xla_tuple %s3, %s4
  %s6 = sld [smem:[#allocation0]]
  $region57: #{tpu_custom_call.1} parent=0
    _
  %s8 = ssub.s32 1, %s6
  %s9 = scalar_select 0, %s8, %s6
  %s11 = sshll.u32 %s0, 4
  %s12 = int_to_ptr.hbm [resolvable:$true] %s11
  %14 = dma.hbm_to_smem %s12, 16, [#allocation3], [#allocation2]
  %16 = dma.done [#allocation2], 16
  %17 = sfence
  $region1: #{tpu_custom_call.1} parent=0
    #allocation4 [shape = 'u8[8192]{0}', space=vmem, size = 0x2000, scoped, tag = 'input window, operand 1']
    #allocation5 [shape = 's32[2]{0}', space=sflag, size = 0x8, scoped, tag = 'scoped memory for tpu_custom_call.1']
    #allocation6 [shape = 's32[2]{0}', space=sflag, size = 0x8, scoped, tag = 'scoped memory for tpu_custom_call.1']
    #allocation7 [shape = 'u8[8192]{0}', space=vmem, size = 0x2000, scoped, tag = 'input window, operand 2']
    #allocation8 [shape = 's32[2]{0}', space=sflag, size = 0x8, scoped, tag = 'scoped memory for tpu_custom_call.1']
    #allocation9 [shape = 'u8[1024]{0}', space=vmem, size = 0x400, scoped, tag = 'output window, operand 1']
    %18 = vsyncpa [#allocation5], 0
    %s19 = scalar_lea.sflag [#allocation5], 1
    %20 = vsyncpa %s19, 0
    %21 = vsyncpa [#allocation8], 0
    %s22 = scalar_lea.sflag [#allocation8], 1
    %23 = vsyncpa %s22, 0
    %24 = vsyncpa [#allocation6], 0
    %s25 = scalar_lea.sflag [#allocation6], 1
    %26 = vsyncpa %s25, 0
    loop: start=0, step=1, limit=4
    $region2: #{tpu_custom_call.1} parent=1 // loop_pre_header
      _
    $region3: #{tpu_custom_call.1} parent=1 // loop_header
      %s28 = sphi 0, %s32
      %p29 = scmp.ge.s32.totalorder %s28, 4
      %s38 = sphi 0, %s40
      %s41 = sphi 0, %s38
      %s42 = sphi 0, %s41
      %s58 = sphi 0, %s42
      %s64 = sphi 0, %s66
      %s67 = sphi 0, %s64
      %s68 = sphi 0, %s67
      %s84 = sphi 0, %s68
      %s90 = sphi 0, %s92
      %s93 = sphi 0, %s90
      %s94 = sphi 0, %s93
      %s110 = sphi 0, %s94
      %s116 = sphi 0, %s118
      %s119 = sphi 0, %s116
      %s120 = sphi 0, %s119
      %s136 = sphi 0, %s120
    $region4: #{tpu_custom_call.1} parent=1 // loop_header_branch
      %31 = sbr.rel (%p29) target = $region8
    $region5: #{tpu_custom_call.1} parent=1 // loop_body
      %s33 = ssub.s32 %s28, 1
      %s34 = ssub.s32 %s28, 2
      %s35 = sadd.s32 %s28, 1
      %s36 = ssub.s32 %s28, %s35
      %p37 = scmp.eq.s32.totalorder %s36, 0
      %s39 = sadd.s32 %s38, 1
      %s40 = scalar_select %p37, %s38, %s39
      %p43 = pneg %p37
      %p44 = scmp.eq.s32.totalorder %s28, 1
      %p45 = por %p43, %p44
      %p46 = scmp.ne.s32.totalorder %s38, %s41
      %p47 = scmp.eq.s32.totalorder %s28, 0
      %p48 = por %p46, %p47
      %p49 = scmp.ne.s32.totalorder %s38, %s41
      %p50 = scmp.eq.s32.totalorder %s33, 1
      %p51 = por %p49, %p50
      %p52 = scmp.ne.s32.totalorder %s41, %s42
      %p53 = scmp.eq.s32.totalorder %s33, 0
      %p54 = por %p52, %p53
      %p55 = scmp.ne.s32.totalorder %s41, %s42
      %p56 = scmp.eq.s32.totalorder %s34, 1
      %p57 = por %p55, %p56
      %p59 = scmp.ne.s32.totalorder %s42, %s58
      %p60 = scmp.eq.s32.totalorder %s34, 0
      %p61 = por %p59, %p60
      %s62 = ssub.s32 %s28, %s35
      %p63 = scmp.eq.s32.totalorder %s62, 0
      %s65 = sadd.s32 %s64, 1
      %s66 = scalar_select %p63, %s64, %s65
      %p69 = pneg %p63
      %p70 = scmp.eq.s32.totalorder %s28, 1
      %p71 = por %p69, %p70
      %p72 = scmp.ne.s32.totalorder %s64, %s67
      %p73 = scmp.eq.s32.totalorder %s28, 0
      %p74 = por %p72, %p73
      %p75 = scmp.ne.s32.totalorder %s64, %s67
      %p76 = scmp.eq.s32.totalorder %s33, 1
      %p77 = por %p75, %p76
      %p78 = scmp.ne.s32.totalorder %s67, %s68
      %p79 = scmp.eq.s32.totalorder %s33, 0
      %p80 = por %p78, %p79
      %p81 = scmp.ne.s32.totalorder %s67, %s68
      %p82 = scmp.eq.s32.totalorder %s34, 1
      %p83 = por %p81, %p82
      %p85 = scmp.ne.s32.totalorder %s68, %s84
      %p86 = scmp.eq.s32.totalorder %s34, 0
      %p87 = por %p85, %p86
      %s88 = ssub.s32 %s28, %s35
      %p89 = scmp.eq.s32.totalorder %s88, 0
      %s91 = sadd.s32 %s90, 1
      %s92 = scalar_select %p89, %s90, %s91
      %p95 = pneg %p89
      %p96 = scmp.eq.s32.totalorder %s28, 1
      %p97 = por %p95, %p96
      %p98 = scmp.ne.s32.totalorder %s90, %s93
      %p99 = scmp.eq.s32.totalorder %s28, 0
      %p100 = por %p98, %p99
      %p101 = scmp.ne.s32.totalorder %s90, %s93
      %p102 = scmp.eq.s32.totalorder %s33, 1
      %p103 = por %p101, %p102
      %p104 = scmp.ne.s32.totalorder %s93, %s94
      %p105 = scmp.eq.s32.totalorder %s33, 0
      %p106 = por %p104, %p105
      %p107 = scmp.ne.s32.totalorder %s93, %s94
      %p108 = scmp.eq.s32.totalorder %s34, 1
      %p109 = por %p107, %p108
      %p111 = scmp.ne.s32.totalorder %s94, %s110
      %p112 = scmp.eq.s32.totalorder %s34, 0
      %p113 = por %p111, %p112
      %s114 = ssub.s32 %s28, %s35
      %p115 = scmp.eq.s32.totalorder %s114, 0
      %s117 = sadd.s32 %s116, 1
      %s118 = scalar_select %p115, %s116, %s117
      %p121 = pneg %p115
      %p122 = scmp.eq.s32.totalorder %s28, 1
      %p123 = por %p121, %p122
      %p124 = scmp.ne.s32.totalorder %s116, %s119
      %p125 = scmp.eq.s32.totalorder %s28, 0
      %p126 = por %p124, %p125
      %p127 = scmp.ne.s32.totalorder %s116, %s119
      %p128 = scmp.eq.s32.totalorder %s33, 1
      %p129 = por %p127, %p128
      %p130 = scmp.ne.s32.totalorder %s119, %s120
      %p131 = scmp.eq.s32.totalorder %s33, 0
      %p132 = por %p130, %p131
      %p133 = scmp.ne.s32.totalorder %s119, %s120
      %p134 = scmp.eq.s32.totalorder %s34, 1
      %p135 = por %p133, %p134
      %p137 = scmp.ne.s32.totalorder %s120, %s136
      %p138 = scmp.eq.s32.totalorder %s34, 0
      %p139 = por %p137, %p138
      %p140 = scmp.le.s32.totalorder 1, %s28
      %p141 = scmp.lt.s32.totalorder %s28, 3
      %p142 = pnand %p140, %p141
      %p143 = pneg %p142
      // Predicated region
      $region9: #{tpu_custom_call.1} parent=5 // pred_check
        _
      $region10: #{tpu_custom_call.1} parent=5 // pred_check_branch
        %145 = sbr.rel (%p142) target = $region12
      $region11: #{tpu_custom_call.1} parent=5 // pred_region
        %s146 = ssub.s32 %s28, 1
      $region12: #{tpu_custom_call.1} parent=5 // pred_fallthru
        _
      %p147 = scmp.lt.s32.totalorder %s28, 2
      // Predicated region
      $region13: #{tpu_custom_call.1} parent=5 // pred_check
        %p148 = pneg %p147
      $region14: #{tpu_custom_call.1} parent=5 // pred_check_branch
        %150 = sbr.rel (%p148) target = $region16
      $region15: #{tpu_custom_call.1} parent=5 // pred_region
        // Predicated region
        $region17: #{tpu_custom_call.1} parent=15 // pred_check
          %p151 = pneg %p48
        $region18: #{tpu_custom_call.1} parent=15 // pred_check_branch
          %153 = sbr.rel (%p151) target = $region20
        $region19: #{tpu_custom_call.1} parent=15 // pred_region
          %s154 = sand.u32 %s38, 1
          %s155 = scalar_lea.sflag [#allocation5], %s154
          %s156 = sand.u32 %s38, 1
          %s157 = smul.addr %s156, 8
          %s158 = scalar_lea.vmem [#allocation4], %s157
          %160 = vsyncadd %s155, 0
          %s161 = smul.addr %s28, 8
          %s162 = scalar_lea.hbm %s1, %s161
          %s164 = sshll.u32 %s162, 4
          %s165 = int_to_ptr.hbm [resolvable:$true] %s164
          %s166 = sshll.u32 %s158, 4
          %s167 = int_to_ptr.vmem [resolvable:$true] %s166
          %169 = dma.hbm_to_vmem [thread:$0]  %s165, 128, %s167, %s155
        $region20: #{tpu_custom_call.1} parent=15 // pred_fallthru
          _
        // Predicated region
        $region21: #{tpu_custom_call.1} parent=15 // pred_check
          %p170 = pneg %p74
        $region22: #{tpu_custom_call.1} parent=15 // pred_check_branch
          %172 = sbr.rel (%p170) target = $region24
        $region23: #{tpu_custom_call.1} parent=15 // pred_region
          %s173 = sand.u32 %s64, 1
          %s174 = scalar_lea.sflag [#allocation8], %s173
          %s175 = sand.u32 %s64, 1
          %s176 = smul.addr %s175, 8
          %s177 = scalar_lea.vmem [#allocation7], %s176
          %179 = vsyncadd %s174, 0
          %s180 = smul.addr %s28, 8
          %s181 = scalar_lea.hbm %s2, %s180
          %s183 = sshll.u32 %s181, 4
          %s184 = int_to_ptr.hbm [resolvable:$true] %s183
          %s185 = sshll.u32 %s177, 4
          %s186 = int_to_ptr.vmem [resolvable:$true] %s185
          %188 = dma.hbm_to_vmem [thread:$0]  %s184, 128, %s186, %s174
        $region24: #{tpu_custom_call.1} parent=15 // pred_fallthru
          _
      $region16: #{tpu_custom_call.1} parent=5 // pred_fallthru
        _
      %p189 = scmp.le.s32.totalorder 1, %s28
      %p190 = scmp.lt.s32.totalorder %s28, 3
      %p191 = pnand %p189, %p190
      %p192 = pneg %p191
      // Predicated region
      $region25: #{tpu_custom_call.1} parent=5 // pred_check
        _
      $region26: #{tpu_custom_call.1} parent=5 // pred_check_branch
        %194 = sbr.rel (%p191) target = $region28
      $region27: #{tpu_custom_call.1} parent=5 // pred_region
        %s195 = ssub.s32 %s28, 1
        %s196 = sand.u32 %s41, 1
        %s197 = scalar_lea.sflag [#allocation5], %s196
        %s198 = sand.u32 %s41, 1
        %s199 = smul.addr %s198, 8
        %s200 = scalar_lea.vmem [#allocation4], %s199
        // Predicated region
        $region29: #{tpu_custom_call.1} parent=27 // pred_check
          %p201 = pneg %p54
        $region30: #{tpu_custom_call.1} parent=27 // pred_check_branch
          %203 = sbr.rel (%p201) target = $region32
        $region31: #{tpu_custom_call.1} parent=27 // pred_region
          %205 = dma.done %s197, 128
        $region32: #{tpu_custom_call.1} parent=27 // pred_fallthru
          _
        %s206 = sand.u32 %s67, 1
        %s207 = scalar_lea.sflag [#allocation8], %s206
        %s208 = sand.u32 %s67, 1
        %s209 = smul.addr %s208, 8
        %s210 = scalar_lea.vmem [#allocation7], %s209
        // Predicated region
        $region33: #{tpu_custom_call.1} parent=27 // pred_check
          %p211 = pneg %p80
        $region34: #{tpu_custom_call.1} parent=27 // pred_check_branch
          %213 = sbr.rel (%p211) target = $region36
        $region35: #{tpu_custom_call.1} parent=27 // pred_region
          %215 = dma.done %s207, 128
        $region36: #{tpu_custom_call.1} parent=27 // pred_fallthru
          _
        %s216 = sand.u32 %s41, 1
        %s217 = scalar_lea.sflag [#allocation5], %s216
        %s218 = sand.u32 %s41, 1
        %s219 = smul.addr %s218, 8
        %s220 = scalar_lea.vmem [#allocation4], %s219
        %p221 = pneg %p54
        %p222 = pneg %p51
        %s223 = sand.u32 %s67, 1
        %s224 = scalar_lea.sflag [#allocation8], %s223
        %s225 = sand.u32 %s67, 1
        %s226 = smul.addr %s225, 8
        %s227 = scalar_lea.vmem [#allocation7], %s226
        %p228 = pneg %p80
        %p229 = pneg %p77
        %p230 = pneg %p106
        %p231 = pneg %p103
        %p232 = scmp.lt.s32.totalorder %s33, 1
        %s233 = scalar_select %p232, %s33, 1
        %s234 = smul.addr %s233, 8
        %s235 = scalar_lea.vmem %s3, %s234
        %p236 = pneg %p132
        %p237 = pneg %p129
        %s238 = sand.u32 %s119, 1
        %s239 = scalar_lea.sflag [#allocation6], %s238
        %s240 = sand.u32 %s119, 1
        %s241 = scalar_lea.vmem [#allocation9], %s240
        %p242 = scmp.lt.s32.totalorder %s33, 1
        %s243 = scalar_select %p242, %s33, 1
        %s244 = smul.addr %s243, 8
        %s245 = scalar_lea.vmem %s3, %s244
        %s247 = sld [smem:[#allocation3 + %s33]]
        %v248 = vld [vmem:[%s200] sm:$0xff]
        %v249 = vld [vmem:[%s210] sm:$0xff]
        %v250 = vstv %s247
        %v251 = vmul.f32 %v248, %v250
        %v252 = vpack.c.bf16 %v251, %v251
        %v253 = vpack.c.bf16 %v249, %v249
        %vm254 = vcmask 261120
        %v256 = vsel %vm254, %v252, 0
        %v259 = vsel %vm254, %v253, 0
        %261 = vmatpush.bf16.xpose.msra.mxu0 0
        %262 = vmatpush.bf16.xpose.msra.mxu0 0
        %263 = vmatpush.bf16.xpose.msra.mxu0 0
        %264 = vmatpush.bf16.xpose.msra.mxu0 0
        %265 = vmatpush.bf16.xpose.msra.mxu0 0
        %266 = vmatpush.bf16.xpose.msra.mxu0 0
        %267 = vmatpush.bf16.xpose.msra.mxu0 0
        %268 = vmatpush.bf16.xpose.msra.mxu0 %v259
        %269 = vmatmul.bf16.gmra.mxu0 %v256
        %v270 = vpop.f32.mrf.mxu0
        %v271 = vadd.f32 0.0, %v270
        %v272 = vpop.f32.mrf.mxu0
        %273 = vdwg.mxu0
        %v274 = vmul.f32 %v251, %v249
        %v275 = vsel %vm254, %v274, 0.0
        %276 = vadd.xlane.f32.xlu0 %v275
        %v277 = vpop.xlane.xlu0 %276
        %vm278 = vcmask 64512
        %v279 = vsel %vm278, %v271, -inf
        %280 = vmax.xlane.f32.xlu0 %v279
        %v281 = vpop.xlane.xlu0 %280
        %v282 = vrot.slane %v281, 4
        %v283 = vmax.f32 %v281, %v282
        %v284 = vrot.slane %v283, 2
        %v285 = vmax.f32 %v283, %v284
        %v286 = vrot.slane %v285, 1
        %v287 = vmax.f32 %v285, %v286
        %v288 = vsub.f32 %v271, %v287
        %v289 = vmul.f32 %v288, 1.442695
        %v290 = vpow.pop %v289
        %v291 = vsel %vm278, %v290, 0.0
        %292 = vadd.xlane.f32.xlu0 %v291
        %v293 = vpop.xlane.xlu0 %292
        %v294 = vrot.slane %v291, 4
        %v295 = vadd.f32 %v291, %v294
        %v296 = vrot.slane %v295, 2
        %v297 = vadd.f32 %v295, %v296
        %v298 = vrot.slane %v297, 1
        %v299 = vadd.f32 %v297, %v298
        %v300 = vmax.f32 %v277, -46.0517
        %v301 = vmax.f32 %v293, 1e-20
        %v302 = vlog2.pop %v301
        %v303 = vmul.f32 %v302, 0.6931472
        %v304 = vadd.f32 %v287, %v303
        %v305 = vmax.f32 %v299, 1e-20
        %v306 = vlog2.pop %v305
        %v307 = vmul.f32 %v306, 0.6931472
        %v308 = vadd.f32 %v287, %v307
        %v309 = vsub.f32 0.0, %v300
        %v310 = vmul.f32 %v304, 0.5
        %v311 = vadd.f32 %v309, %v310
        %vm312 = vcmask 7168
        %313 = vst.msk [vmem:[%s245] sm:$0xff] %vm312, %v311
        %v314 = vmul.f32 %v308, 0.5
        %vm315 = vcmask 57344
        %316 = vst.msk [vmem:[%s241] sm:$0x1] %vm315, %v314
        %p317 = scmp.lt.s32.totalorder %s33, 1
        %s318 = scalar_select %p317, %s33, 1
        %s319 = smul.addr %s318, 8
        %s320 = scalar_lea.vmem %s3, %s319
        %s321 = sand.u32 %s119, 1
        %s322 = scalar_lea.sflag [#allocation6], %s321
        %s323 = sand.u32 %s119, 1
        %s324 = scalar_lea.vmem [#allocation9], %s323
        // Predicated region
        $region37: #{tpu_custom_call.1} parent=27 // pred_check
          %p325 = pneg %p103
        $region38: #{tpu_custom_call.1} parent=27 // pred_check_branch
          %327 = sbr.rel (%p325) target = $region40
        $region39: #{tpu_custom_call.1} parent=27 // pred_region
          _
        $region40: #{tpu_custom_call.1} parent=27 // pred_fallthru
          _
        // Predicated region
        $region41: #{tpu_custom_call.1} parent=27 // pred_check
          %p328 = pneg %p129
        $region42: #{tpu_custom_call.1} parent=27 // pred_check_branch
          %330 = sbr.rel (%p328) target = $region44
        $region43: #{tpu_custom_call.1} parent=27 // pred_region
          %332 = vsyncadd %s322, 0
          %s333 = scalar_lea.hbm %s4, %s33
          %s335 = sshll.u32 %s324, 4
          %s336 = int_to_ptr.vmem [resolvable:$true] %s335
          %s337 = sshll.u32 %s333, 4
          %s338 = int_to_ptr.hbm [resolvable:$true] %s337
          %340 = dma.vmem_to_hbm [thread:$0]  %s336, 16, %s338, %s322
        $region44: #{tpu_custom_call.1} parent=27 // pred_fallthru
          _
      $region28: #{tpu_custom_call.1} parent=5 // pred_fallthru
        _
      %p341 = scmp.le.s32.totalorder 2, %s28
      // Predicated region
      $region45: #{tpu_custom_call.1} parent=5 // pred_check
        %p342 = pneg %p341
      $region46: #{tpu_custom_call.1} parent=5 // pred_check_branch
        %344 = sbr.rel (%p342) target = $region48
      $region47: #{tpu_custom_call.1} parent=5 // pred_region
        %s345 = ssub.s32 %s28, 2
        // Predicated region
        $region49: #{tpu_custom_call.1} parent=47 // pred_check
          %p346 = pneg %p109
        $region50: #{tpu_custom_call.1} parent=47 // pred_check_branch
          %348 = sbr.rel (%p346) target = $region52
        $region51: #{tpu_custom_call.1} parent=47 // pred_region
          %p349 = scmp.lt.s32.totalorder %s34, 1
          %s350 = scalar_select %p349, %s34, 1
          %s351 = smul.addr %s350, 8
          %s352 = scalar_lea.vmem %s3, %s351
        $region52: #{tpu_custom_call.1} parent=47 // pred_fallthru
          _
        // Predicated region
        $region53: #{tpu_custom_call.1} parent=47 // pred_check
          %p353 = pneg %p135
        $region54: #{tpu_custom_call.1} parent=47 // pred_check_branch
          %355 = sbr.rel (%p353) target = $region56
        $region55: #{tpu_custom_call.1} parent=47 // pred_region
          %s356 = sand.u32 %s120, 1
          %s357 = scalar_lea.sflag [#allocation6], %s356
          %s358 = sand.u32 %s120, 1
          %s359 = scalar_lea.vmem [#allocation9], %s358
          %361 = dma.done %s357, 16
        $region56: #{tpu_custom_call.1} parent=47 // pred_fallthru
          _
      $region48: #{tpu_custom_call.1} parent=5 // pred_fallthru
        _
    $region6: #{tpu_custom_call.1} parent=1 // loop_footer
      %s32 = sadd.s32 1, %s28
    $region7: #{tpu_custom_call.1} parent=1 // loop_footer_branch
      %27 = sbr.rel target = $region3
    $region8: #{tpu_custom_call.1} parent=1 // loop_exit
      _
    %362 = vsyncpa [#allocation5], 1
    %s363 = scalar_lea.sflag [#allocation5], 1
    %364 = vsyncpa %s363, 1
    %365 = vsyncpa [#allocation8], 1
    %s366 = scalar_lea.sflag [#allocation8], 1
    %367 = vsyncpa %s366, 1
    %368 = vsyncpa [#allocation6], 1
    %s369 = scalar_lea.sflag [#allocation6], 1
    %370 = vsyncpa %s369, 1

</llo_original>
